<compile_context>
chip_gen: v6e
topology: v6e:2x2x1
jax: 0.10.0
libtpu: 0.0.40
codegen_flags: <defaults>
</compile_context>

<pallas_src>
import functools

import jax
import jax.numpy as jnp
from jax.experimental import pallas as pl
from jax.experimental.pallas import tpu as pltpu


def _mlp_kernel(x_ref,
                w1_ref, b1_ref,
                w2_ref, b2_ref,
                w3_ref, b3_ref,
                w4_ref, b4_ref,
                w5_ref, b5_ref,
                o_ref,
                *, compute_dtype):
    """Whole 5-layer forward for one batch tile. Weights are full resident blocks."""

    def layer(h, w_ref, b_ref, relu):
        # MXU matmul in `compute_dtype` (bf16 on v6e/v7x), f32 accumulate,
        # bias-add and ReLU in f32 on the VPU.
        out = jnp.dot(h.astype(compute_dtype), w_ref[...],
                      preferred_element_type=jnp.float32) + b_ref[...]
        if relu:
            out = jnp.maximum(out, 0.0)
        return out

    h = x_ref[...].astype(jnp.float32)      # x.float()
    h = layer(h, w1_ref, b1_ref, True)      # relu(l1(x))
    h = layer(h, w2_ref, b2_ref, True)      # relu(l2(x))
    h = layer(h, w3_ref, b3_ref, True)      # relu(fc1(x))
    h = layer(h, w4_ref, b4_ref, True)      # relu(fc2(x))
    h = layer(h, w5_ref, b5_ref, False)     # fc3(x)
    o_ref[...] = h.astype(o_ref.dtype)


def init_params(key, input_size, hidden_size, output_size):
    """torch.nn.Linear-style init: U(-1/sqrt(fan_in), 1/sqrt(fan_in)).

    Weights stored already transposed as (in, out); biases as (1, out).
    """
    dims = [(input_size, input_size * 4),
            (input_size * 4, hidden_size),
            (hidden_size, 8),
            (8, 4),
            (4, output_size)]
    params = []
    for (fan_in, fan_out) in dims:
        key, kw, kb = jax.random.split(key, 3)
        bound = 1.0 / jnp.sqrt(jnp.float32(fan_in))
        w = jax.random.uniform(kw, (fan_in, fan_out), jnp.float32, -bound, bound)
        b = jax.random.uniform(kb, (1, fan_out), jnp.float32, -bound, bound)
        params.append((w, b))
    return params


def _round_up(x, m):
    return -(-x // m) * m


def _choose_tile_b(B, tile_b):
    if B <= 256:
        return B                      # single full-batch tile (block == full dim)
    if B <= tile_b:
        # Split into 2 tiles so both v7x TensorCores get work; keep multiple of 8.
        return _round_up(-(-B // 2), 8)
    return tile_b                      # large batch: tile_b (multiple of 256)


@functools.partial(jax.jit, static_argnames=("tile_b", "use_bf16"))
def net_forward(x, params, tile_b=512, use_bf16=True):
    B, F = x.shape
    out_size = params[-1][0].shape[1]
    out_padded = _round_up(out_size, 128)          # lane-dense output store
    compute_dtype = jnp.bfloat16 if use_bf16 else jnp.float32

    # Prepare weights: pad last layer to 128 lanes, cast weights for the MXU,
    # keep biases in f32 for the VPU adds.
    prepared = []
    for idx, (w, b) in enumerate(params):
        if idx == len(params) - 1 and out_padded != out_size:
            w = jnp.pad(w, ((0, 0), (0, out_padded - out_size)))
            b = jnp.pad(b, ((0, 0), (0, out_padded - out_size)))
        prepared.append((w.astype(compute_dtype), b.astype(jnp.float32)))

    tile = _choose_tile_b(B, tile_b)
    grid = (pl.cdiv(B, tile),)

    in_specs = [pl.BlockSpec((tile, F), lambda i: (i, 0))]
    flat_params = []
    for (w, b) in prepared:
        # Full-array blocks with a constant index_map: weights stay resident
        # in VMEM across all batch tiles (no re-DMA after the first step).
        in_specs.append(pl.BlockSpec(w.shape, lambda i: (0, 0)))
        in_specs.append(pl.BlockSpec(b.shape, lambda i: (0, 0)))
        flat_params.extend([w, b])

    flops = sum(2 * B * w.shape[0] * w.shape[1] for (w, _) in prepared)
    bytes_accessed = (x.size * x.dtype.itemsize
                      + B * out_padded * 4
                      + sum(a.size * a.dtype.itemsize for a in flat_params))

    out = pl.pallas_call(
        functools.partial(_mlp_kernel, compute_dtype=compute_dtype),
        out_shape=jax.ShapeDtypeStruct((B, out_padded), jnp.float32),
        grid=grid,
        in_specs=in_specs,
        out_specs=pl.BlockSpec((tile, out_padded), lambda i: (i, 0)),
        compiler_params=pltpu.CompilerParams(
            dimension_semantics=("parallel",)),
        cost_estimate=pl.CostEstimate(
            flops=flops, transcendentals=0, bytes_accessed=bytes_accessed),
    )(x, *flat_params)

    # TODO(synk): torch's final `.double()` cast is dropped — TPU has no native
    # float64; result stays float32 (same values as the f32 forward pass).
    return out[:, :out_size]


def _reference_forward(x, params, use_bf16=True):
    """Pure-JAX reference emulating the kernel's numerics (bf16 MXU inputs, f32 acc)."""
    cdt = jnp.bfloat16 if use_bf16 else jnp.float32
    h = x.astype(jnp.float32)
    for i, (w, b) in enumerate(params):
        h = jnp.dot(h.astype(cdt), w.astype(cdt),
                    preferred_element_type=jnp.float32) + b.astype(jnp.float32)
        if i < len(params) - 1:
            h = jnp.maximum(h, 0.0)
    return h


if __name__ == "__main__":
    input_size, hidden_size, output_size = 16, 32, 2

    key = jax.random.PRNGKey(0)
    key, kx1, kx2 = jax.random.split(key, 3)
    params = init_params(key, input_size, hidden_size, output_size)

    # Small batch: single grid step (block == full batch).
    x_small = jax.random.normal(kx1, (8, input_size), jnp.float32)
    out_small = jax.block_until_ready(net_forward(x_small, params))
    ref_small = _reference_forward(x_small, params, use_bf16=True)
    assert out_small.shape == (8, output_size)
    assert jnp.allclose(out_small, ref_small, atol=2e-3, rtol=2e-3), "mismatch (small)"

    # Larger batch: 2 grid steps with a partial last tile (exercises masked stores).
    x_big = jax.random.normal(kx2, (300, input_size), jnp.float32)
    out_big = jax.block_until_ready(net_forward(x_big, params))
    ref_big = _reference_forward(x_big, params, use_bf16=True)
    assert out_big.shape == (300, output_size)
    assert jnp.allclose(out_big, ref_big, atol=2e-3, rtol=2e-3), "mismatch (big)"

    print("KERNEL_OK")
</pallas_src>

<mosaic_0001>
module attributes {stable_mosaic.version = 11 : i64} {
  func.func @_mlp_kernel(%arg0: i32, %arg1: memref<8x16xf32, #tpu.memory_space<vmem>>, %arg2: memref<16x64xbf16, #tpu.memory_space<vmem>>, %arg3: memref<1x64xf32, #tpu.memory_space<vmem>>, %arg4: memref<64x32xbf16, #tpu.memory_space<vmem>>, %arg5: memref<1x32xf32, #tpu.memory_space<vmem>>, %arg6: memref<32x8xbf16, #tpu.memory_space<vmem>>, %arg7: memref<1x8xf32, #tpu.memory_space<vmem>>, %arg8: memref<8x4xbf16, #tpu.memory_space<vmem>>, %arg9: memref<1x4xf32, #tpu.memory_space<vmem>>, %arg10: memref<4x128xbf16, #tpu.memory_space<vmem>>, %arg11: memref<1x128xf32, #tpu.memory_space<vmem>>, %arg12: memref<8x128xf32, #tpu.memory_space<vmem>>) attributes {dimension_semantics = [#tpu.dimension_semantics<parallel>], iteration_bounds = array<i64: 1>, scalar_prefetch = 0 : i64, scratch_operands = 0 : i64, tpu.core_type = #tpu.core_type<tc>, window_params = [{transform_indices = @transform_0, window_bounds = array<i64: 8, 16>}, {pipeline_mode = #tpu.pipeline_mode<synchronous>, transform_indices = @transform_1, window_bounds = array<i64: 16, 64>}, {pipeline_mode = #tpu.pipeline_mode<synchronous>, transform_indices = @transform_2, window_bounds = array<i64: 1, 64>}, {pipeline_mode = #tpu.pipeline_mode<synchronous>, transform_indices = @transform_3, window_bounds = array<i64: 64, 32>}, {pipeline_mode = #tpu.pipeline_mode<synchronous>, transform_indices = @transform_4, window_bounds = array<i64: 1, 32>}, {pipeline_mode = #tpu.pipeline_mode<synchronous>, transform_indices = @transform_5, window_bounds = array<i64: 32, 8>}, {pipeline_mode = #tpu.pipeline_mode<synchronous>, transform_indices = @transform_6, window_bounds = array<i64: 1, 8>}, {pipeline_mode = #tpu.pipeline_mode<synchronous>, transform_indices = @transform_7, window_bounds = array<i64: 8, 4>}, {pipeline_mode = #tpu.pipeline_mode<synchronous>, transform_indices = @transform_8, window_bounds = array<i64: 1, 4>}, {pipeline_mode = #tpu.pipeline_mode<synchronous>, transform_indices = @transform_9, window_bounds = array<i64: 4, 128>}, {pipeline_mode = #tpu.pipeline_mode<synchronous>, transform_indices = @transform_10, window_bounds = array<i64: 1, 128>}, {transform_indices = @transform_11, window_bounds = array<i64: 8, 128>}]} {
    %c0 = arith.constant 0 : index
    %c0_0 = arith.constant 0 : index
    %0 = vector.load %arg1[%c0, %c0_0] : memref<8x16xf32, #tpu.memory_space<vmem>>, vector<8x16xf32>
    %1 = arith.truncf %0 : vector<8x16xf32> to vector<8x16xbf16>
    %c0_1 = arith.constant 0 : index
    %c0_2 = arith.constant 0 : index
    %2 = vector.load %arg2[%c0_1, %c0_2] : memref<16x64xbf16, #tpu.memory_space<vmem>>, vector<16x64xbf16>
    %cst = arith.constant dense<0.000000e+00> : vector<8x64xf32>
    %3 = tpu.matmul %1, %2, %cst {dimension_numbers = #tpu.dot_dimension_numbers<[1], [0], [0], [1], [0, 0, 1, 1], [], []>} : vector<8x16xbf16>, vector<16x64xbf16>, vector<8x64xf32> -> vector<8x64xf32>
    %c0_3 = arith.constant 0 : index
    %c0_4 = arith.constant 0 : index
    %4 = vector.load %arg3[%c0_3, %c0_4] : memref<1x64xf32, #tpu.memory_space<vmem>>, vector<1x64xf32>
    %5 = vector.broadcast %4 : vector<1x64xf32> to vector<8x64xf32>
    %6 = arith.addf %3, %5 : vector<8x64xf32>
    %cst_5 = arith.constant 0.000000e+00 : f32
    %7 = vector.broadcast %cst_5 : f32 to vector<8x64xf32>
    %8 = arith.maximumf %6, %7 : vector<8x64xf32>
    %9 = arith.truncf %8 : vector<8x64xf32> to vector<8x64xbf16>
    %c0_6 = arith.constant 0 : index
    %c0_7 = arith.constant 0 : index
    %10 = vector.load %arg4[%c0_6, %c0_7] : memref<64x32xbf16, #tpu.memory_space<vmem>>, vector<64x32xbf16>
    %cst_8 = arith.constant dense<0.000000e+00> : vector<8x32xf32>
    %11 = tpu.matmul %9, %10, %cst_8 {dimension_numbers = #tpu.dot_dimension_numbers<[1], [0], [0], [1], [0, 0, 1, 1], [], []>} : vector<8x64xbf16>, vector<64x32xbf16>, vector<8x32xf32> -> vector<8x32xf32>
    %c0_9 = arith.constant 0 : index
    %c0_10 = arith.constant 0 : index
    %12 = vector.load %arg5[%c0_9, %c0_10] : memref<1x32xf32, #tpu.memory_space<vmem>>, vector<1x32xf32>
    %13 = vector.broadcast %12 : vector<1x32xf32> to vector<8x32xf32>
    %14 = arith.addf %11, %13 : vector<8x32xf32>
    %cst_11 = arith.constant 0.000000e+00 : f32
    %15 = vector.broadcast %cst_11 : f32 to vector<8x32xf32>
    %16 = arith.maximumf %14, %15 : vector<8x32xf32>
    %17 = arith.truncf %16 : vector<8x32xf32> to vector<8x32xbf16>
    %c0_12 = arith.constant 0 : index
    %c0_13 = arith.constant 0 : index
    %18 = vector.load %arg6[%c0_12, %c0_13] : memref<32x8xbf16, #tpu.memory_space<vmem>>, vector<32x8xbf16>
    %cst_14 = arith.constant dense<0.000000e+00> : vector<8x8xf32>
    %19 = tpu.matmul %17, %18, %cst_14 {dimension_numbers = #tpu.dot_dimension_numbers<[1], [0], [0], [1], [0, 0, 1, 1], [], []>} : vector<8x32xbf16>, vector<32x8xbf16>, vector<8x8xf32> -> vector<8x8xf32>
    %c0_15 = arith.constant 0 : index
    %c0_16 = arith.constant 0 : index
    %20 = vector.load %arg7[%c0_15, %c0_16] : memref<1x8xf32, #tpu.memory_space<vmem>>, vector<1x8xf32>
    %21 = vector.broadcast %20 : vector<1x8xf32> to vector<8x8xf32>
    %22 = arith.addf %19, %21 : vector<8x8xf32>
    %cst_17 = arith.constant 0.000000e+00 : f32
    %23 = vector.broadcast %cst_17 : f32 to vector<8x8xf32>
    %24 = arith.maximumf %22, %23 : vector<8x8xf32>
    %25 = arith.truncf %24 : vector<8x8xf32> to vector<8x8xbf16>
    %c0_18 = arith.constant 0 : index
    %c0_19 = arith.constant 0 : index
    %26 = vector.load %arg8[%c0_18, %c0_19] : memref<8x4xbf16, #tpu.memory_space<vmem>>, vector<8x4xbf16>
    %cst_20 = arith.constant dense<0.000000e+00> : vector<8x4xf32>
    %27 = tpu.matmul %25, %26, %cst_20 {dimension_numbers = #tpu.dot_dimension_numbers<[1], [0], [0], [1], [0, 0, 1, 1], [], []>} : vector<8x8xbf16>, vector<8x4xbf16>, vector<8x4xf32> -> vector<8x4xf32>
    %c0_21 = arith.constant 0 : index
    %c0_22 = arith.constant 0 : index
    %28 = vector.load %arg9[%c0_21, %c0_22] : memref<1x4xf32, #tpu.memory_space<vmem>>, vector<1x4xf32>
    %29 = vector.broadcast %28 : vector<1x4xf32> to vector<8x4xf32>
    %30 = arith.addf %27, %29 : vector<8x4xf32>
    %cst_23 = arith.constant 0.000000e+00 : f32
    %31 = vector.broadcast %cst_23 : f32 to vector<8x4xf32>
    %32 = arith.maximumf %30, %31 : vector<8x4xf32>
    %33 = arith.truncf %32 : vector<8x4xf32> to vector<8x4xbf16>
    %c0_24 = arith.constant 0 : index
    %c0_25 = arith.constant 0 : index
    %34 = vector.load %arg10[%c0_24, %c0_25] : memref<4x128xbf16, #tpu.memory_space<vmem>>, vector<4x128xbf16>
    %cst_26 = arith.constant dense<0.000000e+00> : vector<8x128xf32>
    %35 = tpu.matmul %33, %34, %cst_26 {dimension_numbers = #tpu.dot_dimension_numbers<[1], [0], [0], [1], [0, 0, 1, 1], [], []>} : vector<8x4xbf16>, vector<4x128xbf16>, vector<8x128xf32> -> vector<8x128xf32>
    %c0_27 = arith.constant 0 : index
    %c0_28 = arith.constant 0 : index
    %36 = vector.load %arg11[%c0_27, %c0_28] : memref<1x128xf32, #tpu.memory_space<vmem>>, vector<1x128xf32>
    %37 = vector.broadcast %36 : vector<1x128xf32> to vector<8x128xf32>
    %38 = arith.addf %35, %37 : vector<8x128xf32>
    %c0_29 = arith.constant 0 : index
    %c0_30 = arith.constant 0 : index
    %39 = vector.load %arg12[%c0_29, %c0_30] : memref<8x128xf32, #tpu.memory_space<vmem>>, vector<8x128xf32>
    tpu.vector_store %arg12[%c0_29, %c0_30], %38 {strides = array<i32>} : memref<8x128xf32, #tpu.memory_space<vmem>>, vector<8x128xf32>,
    return
  }
  func.func @transform_0(%arg0: i32) -> (i32, i32) {
    %c0_i32 = arith.constant 0 : i32
    %c0_i32_0 = arith.constant 0 : i32
    return %arg0, %c0_i32 : i32, i32
  }
  func.func @transform_1(%arg0: i32) -> (i32, i32) {
    %c0_i32 = arith.constant 0 : i32
    %c0_i32_0 = arith.constant 0 : i32
    %c0_i32_1 = arith.constant 0 : i32
    return %c0_i32, %c0_i32_0 : i32, i32
  }
  func.func @transform_2(%arg0: i32) -> (i32, i32) {
    %c0_i32 = arith.constant 0 : i32
    %c0_i32_0 = arith.constant 0 : i32
    %c0_i32_1 = arith.constant 0 : i32
    return %c0_i32, %c0_i32_0 : i32, i32
  }
  func.func @transform_3(%arg0: i32) -> (i32, i32) {
    %c0_i32 = arith.constant 0 : i32
    %c0_i32_0 = arith.constant 0 : i32
    %c0_i32_1 = arith.constant 0 : i32
    return %c0_i32, %c0_i32_0 : i32, i32
  }
  func.func @transform_4(%arg0: i32) -> (i32, i32) {
    %c0_i32 = arith.constant 0 : i32
    %c0_i32_0 = arith.constant 0 : i32
    %c0_i32_1 = arith.constant 0 : i32
    return %c0_i32, %c0_i32_0 : i32, i32
  }
  func.func @transform_5(%arg0: i32) -> (i32, i32) {
    %c0_i32 = arith.constant 0 : i32
    %c0_i32_0 = arith.constant 0 : i32
    %c0_i32_1 = arith.constant 0 : i32
    return %c0_i32, %c0_i32_0 : i32, i32
  }
  func.func @transform_6(%arg0: i32) -> (i32, i32) {
    %c0_i32 = arith.constant 0 : i32
    %c0_i32_0 = arith.constant 0 : i32
    %c0_i32_1 = arith.constant 0 : i32
    return %c0_i32, %c0_i32_0 : i32, i32
  }
  func.func @transform_7(%arg0: i32) -> (i32, i32) {
    %c0_i32 = arith.constant 0 : i32
    %c0_i32_0 = arith.constant 0 : i32
    %c0_i32_1 = arith.constant 0 : i32
    return %c0_i32, %c0_i32_0 : i32, i32
  }
  func.func @transform_8(%arg0: i32) -> (i32, i32) {
    %c0_i32 = arith.constant 0 : i32
    %c0_i32_0 = arith.constant 0 : i32
    %c0_i32_1 = arith.constant 0 : i32
    return %c0_i32, %c0_i32_0 : i32, i32
  }
  func.func @transform_9(%arg0: i32) -> (i32, i32) {
    %c0_i32 = arith.constant 0 : i32
    %c0_i32_0 = arith.constant 0 : i32
    %c0_i32_1 = arith.constant 0 : i32
    return %c0_i32, %c0_i32_0 : i32, i32
  }
  func.func @transform_10(%arg0: i32) -> (i32, i32) {
    %c0_i32 = arith.constant 0 : i32
    %c0_i32_0 = arith.constant 0 : i32
    %c0_i32_1 = arith.constant 0 : i32
    return %c0_i32, %c0_i32_0 : i32, i32
  }
  func.func @transform_11(%arg0: i32) -> (i32, i32) {
    %c0_i32 = arith.constant 0 : i32
    %c0_i32_0 = arith.constant 0 : i32
    return %arg0, %c0_i32 : i32, i32
  }
}

</mosaic_0001>

<llo_original>
// kernel: net_forward.1
$region0: #{net_forward.1}
  #allocation0 [shape = 'u32[]', space=smem, size = 0x4, offset = 0x4, fixed_abs, tag = 'smem constant byte address 0x4 - core index']
  #allocation1 [shape = 'u32[144,128]{1,0:T(1,128)}', space=vmem, size = 0x12000, scoped, tag = 'internal scratch']
  %s0 = inlined_call_operand.vmem [shape: f32[8,16], index: 0, kind: input, shape index: {}]
  %s1 = inlined_call_operand.vmem [shape: bf16[16,64], index: 1, kind: input, shape index: {}]
  %s2 = inlined_call_operand.vmem [shape: f32[1,64], index: 2, kind: input, shape index: {}]
  %s3 = inlined_call_operand.vmem [shape: bf16[64,32], index: 3, kind: input, shape index: {}]
  %s4 = inlined_call_operand.vmem [shape: f32[1,32], index: 4, kind: input, shape index: {}]
  %s5 = inlined_call_operand.vmem [shape: bf16[32,8], index: 5, kind: input, shape index: {}]
  %s6 = inlined_call_operand.vmem [shape: f32[1,8], index: 6, kind: input, shape index: {}]
  %s7 = inlined_call_operand.vmem [shape: bf16[8,4], index: 7, kind: input, shape index: {}]
  %s8 = inlined_call_operand.vmem [shape: f32[1,4], index: 8, kind: input, shape index: {}]
  %s9 = inlined_call_operand.vmem [shape: bf16[4,128], index: 9, kind: input, shape index: {}]
  %s10 = inlined_call_operand.vmem [shape: f32[1,128], index: 10, kind: input, shape index: {}]
  %s11 = inlined_call_operand.vmem [shape: f32[8,128], index: 11, kind: output, shape index: {}]
  %s12 = sld [smem:[#allocation0]]
  $region54: #{net_forward.1} parent=0
    _
  %s14 = ssub.s32 1, %s12
  %s15 = scalar_select 0, %s14, %s12
  // Predicated region
  $region2: #{net_forward.1} parent=0 // pred_check
    _
  $region3: #{net_forward.1} parent=0 // pred_check_branch
    %17 = sbr.rel (0) target = $region5
  $region4: #{net_forward.1} parent=0 // pred_region
    _
  $region5: #{net_forward.1} parent=0 // pred_fallthru
    _
  // Predicated region
  $region6: #{net_forward.1} parent=0 // pred_check
    _
  $region7: #{net_forward.1} parent=0 // pred_check_branch
    %19 = sbr.rel (0) target = $region9
  $region8: #{net_forward.1} parent=0 // pred_region
    _
  $region9: #{net_forward.1} parent=0 // pred_fallthru
    _
  // Predicated region
  $region10: #{net_forward.1} parent=0 // pred_check
    _
  $region11: #{net_forward.1} parent=0 // pred_check_branch
    %21 = sbr.rel (0) target = $region13
  $region12: #{net_forward.1} parent=0 // pred_region
    _
  $region13: #{net_forward.1} parent=0 // pred_fallthru
    _
  // Predicated region
  $region14: #{net_forward.1} parent=0 // pred_check
    _
  $region15: #{net_forward.1} parent=0 // pred_check_branch
    %23 = sbr.rel (0) target = $region17
  $region16: #{net_forward.1} parent=0 // pred_region
    _
  $region17: #{net_forward.1} parent=0 // pred_fallthru
    _
  // Predicated region
  $region18: #{net_forward.1} parent=0 // pred_check
    _
  $region19: #{net_forward.1} parent=0 // pred_check_branch
    %25 = sbr.rel (0) target = $region21
  $region20: #{net_forward.1} parent=0 // pred_region
    _
  $region21: #{net_forward.1} parent=0 // pred_fallthru
    _
  // Predicated region
  $region22: #{net_forward.1} parent=0 // pred_check
    _
  $region23: #{net_forward.1} parent=0 // pred_check_branch
    %27 = sbr.rel (0) target = $region25
  $region24: #{net_forward.1} parent=0 // pred_region
    _
  $region25: #{net_forward.1} parent=0 // pred_fallthru
    _
  // Predicated region
  $region26: #{net_forward.1} parent=0 // pred_check
    _
  $region27: #{net_forward.1} parent=0 // pred_check_branch
    %29 = sbr.rel (0) target = $region29
  $region28: #{net_forward.1} parent=0 // pred_region
    _
  $region29: #{net_forward.1} parent=0 // pred_fallthru
    _
  // Predicated region
  $region30: #{net_forward.1} parent=0 // pred_check
    _
  $region31: #{net_forward.1} parent=0 // pred_check_branch
    %31 = sbr.rel (0) target = $region33
  $region32: #{net_forward.1} parent=0 // pred_region
    _
  $region33: #{net_forward.1} parent=0 // pred_fallthru
    _
  // Predicated region
  $region34: #{net_forward.1} parent=0 // pred_check
    _
  $region35: #{net_forward.1} parent=0 // pred_check_branch
    %33 = sbr.rel (0) target = $region37
  $region36: #{net_forward.1} parent=0 // pred_region
    _
  $region37: #{net_forward.1} parent=0 // pred_fallthru
    _
  // Predicated region
  $region38: #{net_forward.1} parent=0 // pred_check
    _
  $region39: #{net_forward.1} parent=0 // pred_check_branch
    %35 = sbr.rel (0) target = $region41
  $region40: #{net_forward.1} parent=0 // pred_region
    _
  $region41: #{net_forward.1} parent=0 // pred_fallthru
    _
  // Predicated region
  $region42: #{net_forward.1} parent=0 // pred_check
    _
  $region43: #{net_forward.1} parent=0 // pred_check_branch
    %37 = sbr.rel (0) target = $region45
  $region44: #{net_forward.1} parent=0 // pred_region
    _
  $region45: #{net_forward.1} parent=0 // pred_fallthru
    _
  %v39 = vld [vmem:[%s0] sm:$0xff]
  %v40 = vpack.c.bf16 %v39, %v39
  %v41 = vld [vmem:[%s1] sm:$0xf]
  %v42 = vld [vmem:[%s1 + $0x4] sm:$0xf]
  %v43 = vld [vmem:[%s2] sm:$0x1]
  %v45 = vlaneseq
  %v46 = vshrl.u32 %v45, 7
  %v47 = vsub.s32 0, %v46
  %v48 = vrot.slane %v43, %v47
  %v52 = vunpack.c.l.b16 %v41
  %v53 = vunpack.c.l.b16 %v42
  %v54 = vpack.c.b16 %v53, %v52
  %vm56 = vcmask 130048
  %v58 = vsel %vm56, %v40, 0
  %60 = vmatprep.subr.bf16.mxu0 0
  %61 = vmatpush1.bf16.msra.mxu0 0
  %62 = vmatprep.subr.bf16.mxu0 0
  %63 = vmatpush1.bf16.msra.mxu0 0
  %64 = vmatprep.subr.bf16.mxu0 0
  %65 = vmatpush1.bf16.msra.mxu0 0
  %66 = vmatprep.subr.bf16.mxu0 0
  %67 = vmatpush1.bf16.msra.mxu0 0
  %68 = vmatprep.subr.bf16.mxu0 0
  %69 = vmatpush1.bf16.msra.mxu0 0
  %70 = vmatprep.subr.bf16.mxu0 0
  %71 = vmatpush1.bf16.msra.mxu0 0
  %72 = vmatprep.subr.bf16.mxu0 0
  %73 = vmatpush1.bf16.msra.mxu0 0
  %74 = vmatprep.subr.bf16.mxu0 0
  %75 = vmatpush1.bf16.msra.mxu0 %v54
  %76 = vmatprep.subr.bf16.mxu0 0
  %77 = vmatpush2.bf16.msra.mxu0 0
  %78 = vmatprep.subr.bf16.mxu0 0
  %79 = vmatpush2.bf16.msra.mxu0 0
  %80 = vmatprep.subr.bf16.mxu0 0
  %81 = vmatpush2.bf16.msra.mxu0 0
  %82 = vmatprep.subr.bf16.mxu0 0
  %83 = vmatpush2.bf16.msra.mxu0 0
  %84 = vmatprep.subr.bf16.mxu0 0
  %85 = vmatpush2.bf16.msra.mxu0 0
  %86 = vmatprep.subr.bf16.mxu0 0
  %87 = vmatpush2.bf16.msra.mxu0 0
  %88 = vmatprep.subr.bf16.mxu0 0
  %89 = vmatpush2.bf16.msra.mxu0 0
  %90 = vmatprep.subr.bf16.mxu0 0
  %91 = vmatpush2.bf16.msra.mxu0 0
  %92 = vmatprep.mubr.bf16.mxu0 0
  %93 = vmatmul.mubr.bf16.gmra.mxu0 %v58
  %v94 = vpop.f32.mrf.mxu0
  %v95 = vadd.f32 %v48, %v94
  %v96 = vpop.f32.mrf.mxu0
  %v97 = vpop.f32.mrf.mxu0
  %v98 = vpop.f32.mrf.mxu0
  %99 = vdwg.mxu0
  %v100 = vmax.f32 %v95, 0.0
  %v101 = vpack.c.bf16 %v100, %v100
  %v102 = vld [vmem:[%s3] sm:$0xf]
  %v103 = vld [vmem:[%s3 + $0x4] sm:$0xf]
  %v104 = vld [vmem:[%s3 + $0x8] sm:$0xf]
  %v105 = vld [vmem:[%s3 + $0xc] sm:$0xf]
  %v106 = vld [vmem:[%s3 + $0x10] sm:$0xf]
  %v107 = vld [vmem:[%s3 + $0x14] sm:$0xf]
  %v108 = vld [vmem:[%s3 + $0x18] sm:$0xf]
  %v109 = vld [vmem:[%s3 + $0x1c] sm:$0xf]
  %v110 = vld [vmem:[%s4] sm:$0x1]
  %v112 = vlaneseq
  %v113 = vshrl.u32 %v112, 7
  %v114 = vsub.s32 0, %v113
  %v115 = vrot.slane %v110, %v114
  %v125 = vunpack.c.l.b16 %v102
  %v126 = vunpack.c.l.b16 %v103
  %v127 = vunpack.c.l.b16 %v104
  %v128 = vunpack.c.l.b16 %v105
  %v129 = vunpack.c.l.b16 %v106
  %v130 = vunpack.c.l.b16 %v107
  %v131 = vunpack.c.l.b16 %v108
  %v132 = vunpack.c.l.b16 %v109
  %v133 = vpack.c.b16 %v126, %v125
  %v134 = vpack.c.b16 %v128, %v127
  %v135 = vpack.c.b16 %v130, %v129
  %v136 = vpack.c.b16 %v132, %v131
  %vm141 = vcmask 523264
  %v143 = vsel %vm141, %v101, 0
  %145 = vmatprep.subr.bf16.mxu0 0
  %146 = vmatpush1.bf16.msra.mxu0 0
  %147 = vmatprep.subr.bf16.mxu0 0
  %148 = vmatpush1.bf16.msra.mxu0 0
  %149 = vmatprep.subr.bf16.mxu0 0
  %150 = vmatpush1.bf16.msra.mxu0 0
  %151 = vmatprep.subr.bf16.mxu0 0
  %152 = vmatpush1.bf16.msra.mxu0 0
  %153 = vmatprep.subr.bf16.mxu0 0
  %154 = vmatpush1.bf16.msra.mxu0 %v136
  %155 = vmatprep.subr.bf16.mxu0 0
  %156 = vmatpush1.bf16.msra.mxu0 %v135
  %157 = vmatprep.subr.bf16.mxu0 0
  %158 = vmatpush1.bf16.msra.mxu0 %v134
  %159 = vmatprep.subr.bf16.mxu0 0
  %160 = vmatpush1.bf16.msra.mxu0 %v133
  %161 = vmatprep.subr.bf16.mxu0 0
  %162 = vmatpush2.bf16.msra.mxu0 0
  %163 = vmatprep.subr.bf16.mxu0 0
  %164 = vmatpush2.bf16.msra.mxu0 0
  %165 = vmatprep.subr.bf16.mxu0 0
  %166 = vmatpush2.bf16.msra.mxu0 0
  %167 = vmatprep.subr.bf16.mxu0 0
  %168 = vmatpush2.bf16.msra.mxu0 0
  %169 = vmatprep.subr.bf16.mxu0 0
  %170 = vmatpush2.bf16.msra.mxu0 0
  %171 = vmatprep.subr.bf16.mxu0 0
  %172 = vmatpush2.bf16.msra.mxu0 0
  %173 = vmatprep.subr.bf16.mxu0 0
  %174 = vmatpush2.bf16.msra.mxu0 0
  %175 = vmatprep.subr.bf16.mxu0 0
  %176 = vmatpush2.bf16.msra.mxu0 0
  %177 = vmatprep.mubr.bf16.mxu0 0
  %178 = vmatmul.mubr.bf16.gmra.mxu0 %v143
  %v179 = vpop.f32.mrf.mxu0
  %v180 = vadd.f32 %v115, %v179
  %v181 = vpop.f32.mrf.mxu0
  %v182 = vpop.f32.mrf.mxu0
  %v183 = vpop.f32.mrf.mxu0
  %184 = vdwg.mxu0
  %v185 = vmax.f32 %v180, 0.0
  %v186 = vpack.c.bf16 %v185, %v185
  %v187 = vld [vmem:[%s5] sm:$0xf]
  %v188 = vld [vmem:[%s5 + $0x4] sm:$0xf]
  %v189 = vld [vmem:[%s5 + $0x8] sm:$0xf]
  %v190 = vld [vmem:[%s5 + $0xc] sm:$0xf]
  %v191 = vld [vmem:[%s6] sm:$0x1]
  %v193 = vlaneseq
  %v194 = vshrl.u32 %v193, 7
  %v195 = vsub.s32 0, %v194
  %v196 = vrot.slane %v191, %v195
  %v202 = vunpack.c.l.b16 %v187
  %v203 = vunpack.c.l.b16 %v188
  %v204 = vunpack.c.l.b16 %v189
  %v205 = vunpack.c.l.b16 %v190
  %v206 = vpack.c.b16 %v203, %v202
  %v207 = vpack.c.b16 %v205, %v204
  %vm210 = vcmask 261120
  %v212 = vsel %vm210, %v186, 0
  %214 = vmatprep.subr.bf16.mxu0 0
  %215 = vmatpush1.bf16.msra.mxu0 0
  %216 = vmatprep.subr.bf16.mxu0 0
  %217 = vmatpush1.bf16.msra.mxu0 0
  %218 = vmatprep.subr.bf16.mxu0 0
  %219 = vmatpush1.bf16.msra.mxu0 0
  %220 = vmatprep.subr.bf16.mxu0 0
  %221 = vmatpush1.bf16.msra.mxu0 0
  %222 = vmatprep.subr.bf16.mxu0 0
  %223 = vmatpush1.bf16.msra.mxu0 0
  %224 = vmatprep.subr.bf16.mxu0 0
  %225 = vmatpush1.bf16.msra.mxu0 0
  %226 = vmatprep.subr.bf16.mxu0 0
  %227 = vmatpush1.bf16.msra.mxu0 %v207
  %228 = vmatprep.subr.bf16.mxu0 0
  %229 = vmatpush1.bf16.msra.mxu0 %v206
  %230 = vmatprep.subr.bf16.mxu0 0
  %231 = vmatpush2.bf16.msra.mxu0 0
  %232 = vmatprep.subr.bf16.mxu0 0
  %233 = vmatpush2.bf16.msra.mxu0 0
  %234 = vmatprep.subr.bf16.mxu0 0
  %235 = vmatpush2.bf16.msra.mxu0 0
  %236 = vmatprep.subr.bf16.mxu0 0
  %237 = vmatpush2.bf16.msra.mxu0 0
  %238 = vmatprep.subr.bf16.mxu0 0
  %239 = vmatpush2.bf16.msra.mxu0 0
  %240 = vmatprep.subr.bf16.mxu0 0
  %241 = vmatpush2.bf16.msra.mxu0 0
  %242 = vmatprep.subr.bf16.mxu0 0
  %243 = vmatpush2.bf16.msra.mxu0 0
  %244 = vmatprep.subr.bf16.mxu0 0
  %245 = vmatpush2.bf16.msra.mxu0 0
  %246 = vmatprep.mubr.bf16.mxu0 0
  %247 = vmatmul.mubr.bf16.gmra.mxu0 %v212
  %v248 = vpop.f32.mrf.mxu0
  %v249 = vadd.f32 %v196, %v248
  %v250 = vpop.f32.mrf.mxu0
  %v251 = vpop.f32.mrf.mxu0
  %v252 = vpop.f32.mrf.mxu0
  %253 = vdwg.mxu0
  %v254 = vmax.f32 %v249, 0.0
  %v255 = vpack.c.bf16 %v254, %v254
  %v256 = vld [vmem:[%s7] sm:$0xf]
  %v257 = vld [vmem:[%s8] sm:$0x1]
  %v259 = vlaneseq
  %v260 = vshrl.u32 %v259, 7
  %v261 = vsub.s32 0, %v260
  %v262 = vrot.slane %v257, %v261
  %vm264 = vcmask 64512
  %v266 = vsel %vm264, %v255, 0
  %vm268 = vcmask 1043456
  %v270 = vsel %vm268, %v256, 0
  %272 = vmatprep.subr.bf16.mxu0 0
  %273 = vmatpush1.bf16.msra.mxu0 0
  %274 = vmatprep.subr.bf16.mxu0 0
  %275 = vmatpush1.bf16.msra.mxu0 0
  %276 = vmatprep.subr.bf16.mxu0 0
  %277 = vmatpush1.bf16.msra.mxu0 0
  %278 = vmatprep.subr.bf16.mxu0 0
  %279 = vmatpush1.bf16.msra.mxu0 0
  %280 = vmatprep.subr.bf16.mxu0 0
  %281 = vmatpush1.bf16.msra.mxu0 0
  %282 = vmatprep.subr.bf16.mxu0 0
  %283 = vmatpush1.bf16.msra.mxu0 0
  %284 = vmatprep.subr.bf16.mxu0 0
  %285 = vmatpush1.bf16.msra.mxu0 0
  %286 = vmatprep.subr.bf16.mxu0 0
  %287 = vmatpush1.bf16.msra.mxu0 %v270
  %288 = vmatprep.subr.bf16.mxu0 0
  %289 = vmatpush2.bf16.msra.mxu0 0
  %290 = vmatprep.subr.bf16.mxu0 0
  %291 = vmatpush2.bf16.msra.mxu0 0
  %292 = vmatprep.subr.bf16.mxu0 0
  %293 = vmatpush2.bf16.msra.mxu0 0
  %294 = vmatprep.subr.bf16.mxu0 0
  %295 = vmatpush2.bf16.msra.mxu0 0
  %296 = vmatprep.subr.bf16.mxu0 0
  %297 = vmatpush2.bf16.msra.mxu0 0
  %298 = vmatprep.subr.bf16.mxu0 0
  %299 = vmatpush2.bf16.msra.mxu0 0
  %300 = vmatprep.subr.bf16.mxu0 0
  %301 = vmatpush2.bf16.msra.mxu0 0
  %302 = vmatprep.subr.bf16.mxu0 0
  %303 = vmatpush2.bf16.msra.mxu0 0
  %304 = vmatprep.mubr.bf16.mxu0 0
  %305 = vmatmul.mubr.bf16.gmra.mxu0 %v266
  %v306 = vpop.f32.mrf.mxu0
  %v307 = vadd.f32 %v262, %v306
  %v308 = vpop.f32.mrf.mxu0
  %v309 = vpop.f32.mrf.mxu0
  %v310 = vpop.f32.mrf.mxu0
  %311 = vdwg.mxu0
  %v312 = vmax.f32 %v307, 0.0
  %v313 = vpack.c.bf16 %v312, %v312
  %v314 = vld [vmem:[%s9] sm:$0x3]
  %v315 = vld [vmem:[%s10] sm:$0x1]
  %v317 = vlaneseq
  %v318 = vshrl.u32 %v317, 7
  %v319 = vsub.s32 0, %v318
  %v320 = vrot.slane %v315, %v319
  %vm322 = vcmask 31744
  %v324 = vsel %vm322, %v313, 0
  %vm326 = vcmask 1041408
  %v328 = vsel %vm326, %v314, 0
  %330 = vmatprep.subr.bf16.mxu0 0
  %331 = vmatpush1.bf16.msra.mxu0 0
  %332 = vmatprep.subr.bf16.mxu0 0
  %333 = vmatpush1.bf16.msra.mxu0 0
  %334 = vmatprep.subr.bf16.mxu0 0
  %335 = vmatpush1.bf16.msra.mxu0 0
  %336 = vmatprep.subr.bf16.mxu0 0
  %337 = vmatpush1.bf16.msra.mxu0 0
  %338 = vmatprep.subr.bf16.mxu0 0
  %339 = vmatpush1.bf16.msra.mxu0 0
  %340 = vmatprep.subr.bf16.mxu0 0
  %341 = vmatpush1.bf16.msra.mxu0 0
  %342 = vmatprep.subr.bf16.mxu0 0
  %343 = vmatpush1.bf16.msra.mxu0 0
  %344 = vmatprep.subr.bf16.mxu0 0
  %345 = vmatpush1.bf16.msra.mxu0 %v328
  %346 = vmatprep.subr.bf16.mxu0 0
  %347 = vmatpush2.bf16.msra.mxu0 0
  %348 = vmatprep.subr.bf16.mxu0 0
  %349 = vmatpush2.bf16.msra.mxu0 0
  %350 = vmatprep.subr.bf16.mxu0 0
  %351 = vmatpush2.bf16.msra.mxu0 0
  %352 = vmatprep.subr.bf16.mxu0 0
  %353 = vmatpush2.bf16.msra.mxu0 0
  %354 = vmatprep.subr.bf16.mxu0 0
  %355 = vmatpush2.bf16.msra.mxu0 0
  %356 = vmatprep.subr.bf16.mxu0 0
  %357 = vmatpush2.bf16.msra.mxu0 0
  %358 = vmatprep.subr.bf16.mxu0 0
  %359 = vmatpush2.bf16.msra.mxu0 0
  %360 = vmatprep.subr.bf16.mxu0 0
  %361 = vmatpush2.bf16.msra.mxu0 0
  %362 = vmatprep.mubr.bf16.mxu0 0
  %363 = vmatmul.mubr.bf16.gmra.mxu0 %v324
  %v364 = vpop.f32.mrf.mxu0
  %v365 = vadd.f32 %v320, %v364
  %v366 = vpop.f32.mrf.mxu0
  %v367 = vpop.f32.mrf.mxu0
  %v368 = vpop.f32.mrf.mxu0
  %369 = vdwg.mxu0
  %370 = vst [vmem:[%s11] sm:$0xff] %v365
  // Predicated region
  $region46: #{net_forward.1} parent=0 // pred_check
    _
  $region47: #{net_forward.1} parent=0 // pred_check_branch
    %372 = sbr.rel (0) target = $region49
  $region48: #{net_forward.1} parent=0 // pred_region
    _
  $region49: #{net_forward.1} parent=0 // pred_fallthru
    _
  // Predicated region
  $region50: #{net_forward.1} parent=0 // pred_check
    _
  $region51: #{net_forward.1} parent=0 // pred_check_branch
    %374 = sbr.rel (0) target = $region53
  $region52: #{net_forward.1} parent=0 // pred_region
    _
  $region53: #{net_forward.1} parent=0 // pred_fallthru
    _

</llo_original>
